<compile_context>
chip_gen: v6e
topology: v6e:2x2x1
jax: 0.10.0
libtpu: 0.0.40
codegen_flags: <defaults>
</compile_context>

<pallas_src>
import functools

import jax
import jax.numpy as jnp
import numpy as np
from jax.experimental import pallas as pl
from jax.experimental.pallas import tpu as pltpu


def _round_up(n, m):
    return ((n + m - 1) // m) * m


def _pick_tile(dim, target, align):
    """Largest tile <= target that is a multiple of `align` and divides `dim`
    (falls back to the full dimension, which is always a legal block)."""
    if dim <= target:
        return dim
    t = (target // align) * align
    while t >= align:
        if dim % t == 0:
            return t
        t -= align
    return dim


def _mlp_ffn_kernel(x_ref, w1_ref, m1_ref, w2_ref, m2_ref, o_ref, acc_ref):
    """One (row_tile, ff_tile) grid step of the fused FFN."""
    f = pl.program_id(1)

    @pl.when(f == 0)
    def _init():
        acc_ref[...] = jnp.zeros_like(acc_ref)

    # (tm, d_model) @ (d_model, tf) -> hidden tile, f32 accumulation on MXU.
    h = jnp.dot(x_ref[...], w1_ref[...], preferred_element_type=jnp.float32)
    h = jax.nn.gelu(h, approximate=True)             # activation
    h = h * m1_ref[...].astype(jnp.float32)          # dropout1 (pre-scaled mask)

    # Partial contribution of this ff-tile to the output: (tm, tf) @ (tf, d_model).
    acc_ref[...] += jnp.dot(h.astype(x_ref.dtype), w2_ref[...],
                            preferred_element_type=jnp.float32)

    @pl.when(f == pl.num_programs(1) - 1)
    def _finalize():
        out = acc_ref[...] * m2_ref[...].astype(jnp.float32)   # dropout2
        o_ref[...] = out.astype(o_ref.dtype)


def mlp_ffn(x, w1t, w2t, *, dropout=0.0, training=False, rng_key=None,
            masks=None, tile_rows=256, tile_ff=512):
    """Forward pass matching the PyTorch MlpFFN module.

    Args:
      x:    (..., d_model) input.
      w1t:  (d_model, dim_feedforward)  == linear1.weight.T  (no bias).
      w2t:  (dim_feedforward, d_model)  == last_linear.weight.T (no bias).
      dropout/training: nn.Dropout semantics (identity unless training & p>0).
      rng_key: key for dropout masks (required if dropout active, masks=None).
      masks: optional explicit (mask1, mask2) pre-scaled inverted-dropout masks.
    """
    d_model = x.shape[-1]
    dff = w1t.shape[1]
    assert w1t.shape == (d_model, dff)
    assert w2t.shape == (dff, d_model)

    lead = x.shape[:-1]
    x2 = x.reshape(-1, d_model)
    n = x2.shape[0]

    keep = 1.0 - float(dropout)
    use_dropout = training and float(dropout) > 0.0
    if masks is not None:
        m1, m2 = masks
        m1 = m1.reshape(n, dff).astype(x2.dtype)
        m2 = m2.reshape(n, d_model).astype(x2.dtype)
    elif use_dropout:
        assert rng_key is not None, "rng_key required when dropout is active"
        k1, k2 = jax.random.split(rng_key)
        m1 = jax.random.bernoulli(k1, keep, (n, dff)).astype(x2.dtype) / keep
        m2 = jax.random.bernoulli(k2, keep, (n, d_model)).astype(x2.dtype) / keep
    else:
        m1 = jnp.ones((n, dff), dtype=x2.dtype)
        m2 = jnp.ones((n, d_model), dtype=x2.dtype)

    # Pad the row axis to a multiple of 8 so all blocks are sublane aligned.
    n_pad = _round_up(n, 8)
    if n_pad != n:
        pad = n_pad - n
        x2 = jnp.pad(x2, ((0, pad), (0, 0)))
        m1 = jnp.pad(m1, ((0, pad), (0, 0)))
        m2 = jnp.pad(m2, ((0, pad), (0, 0)))

    tm = _pick_tile(n_pad, tile_rows, 8)    # row tile (parallel axis)
    tf = _pick_tile(dff, tile_ff, 128)      # feed-forward tile (reduction axis)
    grid = (n_pad // tm, dff // tf)

    out = pl.pallas_call(
        _mlp_ffn_kernel,
        out_shape=jax.ShapeDtypeStruct((n_pad, d_model), x2.dtype),
        grid_spec=pltpu.PrefetchScalarGridSpec(
            num_scalar_prefetch=0,
            grid=grid,
            in_specs=[
                pl.BlockSpec((tm, d_model), lambda i, f: (i, 0)),   # x rows
                pl.BlockSpec((d_model, tf), lambda i, f: (0, f)),   # W1^T cols
                pl.BlockSpec((tm, tf), lambda i, f: (i, f)),        # dropout1 mask
                pl.BlockSpec((tf, d_model), lambda i, f: (f, 0)),   # W2^T rows
                pl.BlockSpec((tm, d_model), lambda i, f: (i, 0)),   # dropout2 mask
            ],
            out_specs=pl.BlockSpec((tm, d_model), lambda i, f: (i, 0)),
            scratch_shapes=[pltpu.VMEM((tm, d_model), jnp.float32)],
        ),
        compiler_params=pltpu.CompilerParams(
            dimension_semantics=("parallel", "arbitrary")),
    )(x2, w1t, m1, w2t, m2)

    return out[:n].reshape(*lead, d_model)


def _reference(x, w1t, w2t, m1, m2):
    h = jax.nn.gelu(x.reshape(-1, x.shape[-1]) @ w1t, approximate=True)
    h = h * m1
    y = (h @ w2t) * m2
    return y.reshape(x.shape)


if __name__ == "__main__":
    key = jax.random.PRNGKey(0)
    kx, kw1, kw2, km1, km2 = jax.random.split(key, 5)

    batch, seq, d_model, dff = 2, 8, 32, 64
    dropout = 0.1
    keep = 1.0 - dropout

    x = jax.random.normal(kx, (batch, seq, d_model), dtype=jnp.float32)
    # torch nn.Linear stores weight as (out_features, in_features); the kernel
    # consumes the transposed layouts.
    w1t = jax.random.normal(kw1, (d_model, dff), dtype=jnp.float32) / np.sqrt(d_model)
    w2t = jax.random.normal(kw2, (dff, d_model), dtype=jnp.float32) / np.sqrt(dff)

    n = batch * seq
    # --- eval / dropout-inactive path: masks are all-ones -> plain FFN. ---
    out_eval = jax.block_until_ready(
        mlp_ffn(x, w1t, w2t, dropout=dropout, training=False))
    ones1 = jnp.ones((n, dff), jnp.float32)
    ones2 = jnp.ones((n, d_model), jnp.float32)
    ref_eval = _reference(x, w1t, w2t, ones1, ones2)
    np.testing.assert_allclose(np.asarray(out_eval), np.asarray(ref_eval),
                               rtol=1e-3, atol=1e-3)

    # --- training path: explicit inverted-dropout masks, checked vs reference. ---
    m1 = jax.random.bernoulli(km1, keep, (n, dff)).astype(jnp.float32) / keep
    m2 = jax.random.bernoulli(km2, keep, (n, d_model)).astype(jnp.float32) / keep
    out_train = jax.block_until_ready(
        mlp_ffn(x, w1t, w2t, dropout=dropout, training=True, masks=(m1, m2)))
    ref_train = _reference(x, w1t, w2t, m1, m2)
    np.testing.assert_allclose(np.asarray(out_train), np.asarray(ref_train),
                               rtol=1e-3, atol=1e-3)
    assert out_train.shape == x.shape and bool(jnp.all(jnp.isfinite(out_train)))

    print("KERNEL_OK")
</pallas_src>

<mosaic_0001>
module attributes {stable_mosaic.version = 11 : i64} {
  func.func @_mlp_ffn_kernel(%arg0: i32, %arg1: i32, %arg2: memref<16x32xf32, #tpu.memory_space<vmem>>, %arg3: memref<32x64xf32, #tpu.memory_space<vmem>>, %arg4: memref<16x64xf32, #tpu.memory_space<vmem>>, %arg5: memref<64x32xf32, #tpu.memory_space<vmem>>, %arg6: memref<16x32xf32, #tpu.memory_space<vmem>>, %arg7: memref<16x32xf32, #tpu.memory_space<vmem>>, %arg8: memref<16x32xf32, #tpu.memory_space<vmem>>) attributes {dimension_semantics = [#tpu.dimension_semantics<parallel>, #tpu.dimension_semantics<arbitrary>], iteration_bounds = array<i64: 1, 1>, scalar_prefetch = 0 : i64, scratch_operands = 1 : i64, tpu.core_type = #tpu.core_type<tc>, window_params = [{transform_indices = @transform_0, window_bounds = array<i64: 16, 32>}, {transform_indices = @transform_1, window_bounds = array<i64: 32, 64>}, {transform_indices = @transform_2, window_bounds = array<i64: 16, 64>}, {transform_indices = @transform_3, window_bounds = array<i64: 64, 32>}, {transform_indices = @transform_4, window_bounds = array<i64: 16, 32>}, {transform_indices = @transform_5, window_bounds = array<i64: 16, 32>}]} {
    %c0_i32 = arith.constant 0 : i32
    %0 = arith.cmpi eq, %arg1, %c0_i32 : i32
    %1 = arith.extui %0 : i1 to i32
    %c0_i32_0 = arith.constant 0 : i32
    %2 = arith.cmpi ne, %1, %c0_i32_0 : i32
    scf.if %2 {
      %cst_19 = arith.constant 0.000000e+00 : f32
      %29 = vector.broadcast %cst_19 : f32 to vector<16x32xf32>
      %c0_20 = arith.constant 0 : index
      %c0_21 = arith.constant 0 : index
      %30 = vector.load %arg8[%c0_20, %c0_21] : memref<16x32xf32, #tpu.memory_space<vmem>>, vector<16x32xf32>
      tpu.vector_store %arg8[%c0_20, %c0_21], %29 {strides = array<i32>} : memref<16x32xf32, #tpu.memory_space<vmem>>, vector<16x32xf32>,
    } else {
    }
    %c0 = arith.constant 0 : index
    %c0_1 = arith.constant 0 : index
    %3 = vector.load %arg2[%c0, %c0_1] : memref<16x32xf32, #tpu.memory_space<vmem>>, vector<16x32xf32>
    %c0_2 = arith.constant 0 : index
    %c0_3 = arith.constant 0 : index
    %4 = vector.load %arg3[%c0_2, %c0_3] : memref<32x64xf32, #tpu.memory_space<vmem>>, vector<32x64xf32>
    %cst = arith.constant dense<0.000000e+00> : vector<16x64xf32>
    %5 = tpu.matmul %3, %4, %cst {dimension_numbers = #tpu.dot_dimension_numbers<[1], [0], [0], [1], [0, 0, 1, 1], [], []>} : vector<16x32xf32>, vector<32x64xf32>, vector<16x64xf32> -> vector<16x64xf32>
    %6 = arith.mulf %5, %5 : vector<16x64xf32>
    %7 = arith.mulf %5, %6 : vector<16x64xf32>
    %cst_4 = arith.constant 4.471500e-02 : f32
    %8 = vector.broadcast %cst_4 : f32 to vector<16x64xf32>
    %9 = arith.mulf %8, %7 : vector<16x64xf32>
    %10 = arith.addf %5, %9 : vector<16x64xf32>
    %cst_5 = arith.constant 0.797884583 : f32
    %11 = vector.broadcast %cst_5 : f32 to vector<16x64xf32>
    %12 = arith.mulf %11, %10 : vector<16x64xf32>
    %13 = math.tanh %12 : vector<16x64xf32>
    %cst_6 = arith.constant 1.000000e+00 : f32
    %14 = vector.broadcast %cst_6 : f32 to vector<16x64xf32>
    %15 = arith.addf %14, %13 : vector<16x64xf32>
    %cst_7 = arith.constant 5.000000e-01 : f32
    %16 = vector.broadcast %cst_7 : f32 to vector<16x64xf32>
    %17 = arith.mulf %16, %15 : vector<16x64xf32>
    %18 = arith.mulf %5, %17 : vector<16x64xf32>
    %c0_8 = arith.constant 0 : index
    %c0_9 = arith.constant 0 : index
    %19 = vector.load %arg4[%c0_8, %c0_9] : memref<16x64xf32, #tpu.memory_space<vmem>>, vector<16x64xf32>
    %20 = arith.mulf %18, %19 : vector<16x64xf32>
    %c0_10 = arith.constant 0 : index
    %c0_11 = arith.constant 0 : index
    %21 = vector.load %arg8[%c0_10, %c0_11] : memref<16x32xf32, #tpu.memory_space<vmem>>, vector<16x32xf32>
    %c0_12 = arith.constant 0 : index
    %c0_13 = arith.constant 0 : index
    %22 = vector.load %arg5[%c0_12, %c0_13] : memref<64x32xf32, #tpu.memory_space<vmem>>, vector<64x32xf32>
    %cst_14 = arith.constant dense<0.000000e+00> : vector<16x32xf32>
    %23 = tpu.matmul %20, %22, %cst_14 {dimension_numbers = #tpu.dot_dimension_numbers<[1], [0], [0], [1], [0, 0, 1, 1], [], []>} : vector<16x64xf32>, vector<64x32xf32>, vector<16x32xf32> -> vector<16x32xf32>
    %24 = arith.addf %21, %23 : vector<16x32xf32>
    %c0_15 = arith.constant 0 : index
    %c0_16 = arith.constant 0 : index
    %25 = vector.load %arg8[%c0_15, %c0_16] : memref<16x32xf32, #tpu.memory_space<vmem>>, vector<16x32xf32>
    tpu.vector_store %arg8[%c0_15, %c0_16], %24 {strides = array<i32>} : memref<16x32xf32, #tpu.memory_space<vmem>>, vector<16x32xf32>,
    %c0_i32_17 = arith.constant 0 : i32
    %26 = arith.cmpi eq, %arg1, %c0_i32_17 : i32
    %27 = arith.extui %26 : i1 to i32
    %c0_i32_18 = arith.constant 0 : i32
    %28 = arith.cmpi ne, %27, %c0_i32_18 : i32
    scf.if %28 {
      %c0_19 = arith.constant 0 : index
      %c0_20 = arith.constant 0 : index
      %29 = vector.load %arg8[%c0_19, %c0_20] : memref<16x32xf32, #tpu.memory_space<vmem>>, vector<16x32xf32>
      %c0_21 = arith.constant 0 : index
      %c0_22 = arith.constant 0 : index
      %30 = vector.load %arg6[%c0_21, %c0_22] : memref<16x32xf32, #tpu.memory_space<vmem>>, vector<16x32xf32>
      %31 = arith.mulf %29, %30 : vector<16x32xf32>
      %c0_23 = arith.constant 0 : index
      %c0_24 = arith.constant 0 : index
      %32 = vector.load %arg7[%c0_23, %c0_24] : memref<16x32xf32, #tpu.memory_space<vmem>>, vector<16x32xf32>
      tpu.vector_store %arg7[%c0_23, %c0_24], %31 {strides = array<i32>} : memref<16x32xf32, #tpu.memory_space<vmem>>, vector<16x32xf32>,
    } else {
    }
    return
  }
  func.func @transform_0(%arg0: i32, %arg1: i32) -> (i32, i32) {
    %c0_i32 = arith.constant 0 : i32
    %c0_i32_0 = arith.constant 0 : i32
    return %arg0, %c0_i32 : i32, i32
  }
  func.func @transform_1(%arg0: i32, %arg1: i32) -> (i32, i32) {
    %c0_i32 = arith.constant 0 : i32
    %c0_i32_0 = arith.constant 0 : i32
    return %c0_i32, %arg1 : i32, i32
  }
  func.func @transform_2(%arg0: i32, %arg1: i32) -> (i32, i32) {
    %c0_i32 = arith.constant 0 : i32
    return %arg0, %arg1 : i32, i32
  }
  func.func @transform_3(%arg0: i32, %arg1: i32) -> (i32, i32) {
    %c0_i32 = arith.constant 0 : i32
    %c0_i32_0 = arith.constant 0 : i32
    return %arg1, %c0_i32 : i32, i32
  }
  func.func @transform_4(%arg0: i32, %arg1: i32) -> (i32, i32) {
    %c0_i32 = arith.constant 0 : i32
    %c0_i32_0 = arith.constant 0 : i32
    return %arg0, %c0_i32 : i32, i32
  }
  func.func @transform_5(%arg0: i32, %arg1: i32) -> (i32, i32) {
    %c0_i32 = arith.constant 0 : i32
    %c0_i32_0 = arith.constant 0 : i32
    return %arg0, %c0_i32 : i32, i32
  }
}

</mosaic_0001>

<llo_original>
// kernel: tpu_custom_call.1
$region0: #{tpu_custom_call.1}
  #allocation0 [shape = 'u32[]', space=smem, size = 0x4, offset = 0x4, fixed_abs, tag = 'smem constant byte address 0x4 - core index']
  #allocation1 [shape = 'u32[144,128]{1,0:T(1,128)}', space=vmem, size = 0x12000, scoped, tag = 'internal scratch']
  #allocation2 [shape = 'f32[16,32]{1,0:T(8,128)}', space=vmem, size = 0x2000, scoped, tag = 'scratch operand']
  %s0 = inlined_call_operand.vmem [shape: f32[16,32], index: 0, kind: input, shape index: {}]
  %s1 = inlined_call_operand.vmem [shape: f32[32,64], index: 1, kind: input, shape index: {}]
  %s2 = inlined_call_operand.vmem [shape: f32[16,64], index: 2, kind: input, shape index: {}]
  %s3 = inlined_call_operand.vmem [shape: f32[64,32], index: 3, kind: input, shape index: {}]
  %s4 = inlined_call_operand.vmem [shape: f32[16,32], index: 4, kind: input, shape index: {}]
  %s5 = inlined_call_operand.hbm [shape: f32[16,32], index: 5, kind: output, shape index: {}]
  %s6 = sld [smem:[#allocation0]]
  $region38: #{tpu_custom_call.1} parent=0
    _
  %s8 = ssub.s32 1, %s6
  %s9 = scalar_select 0, %s8, %s6
  $region1: #{tpu_custom_call.1} parent=0
    #allocation3 [shape = 'u8[8192]{0}', space=vmem, size = 0x2000, scoped, tag = 'output window, operand 0, single buffered']
    #allocation4 [shape = 's32[1]{0}', space=sflag, size = 0x4, scoped, tag = 'scoped memory for tpu_custom_call.1']
    %10 = vsyncpa [#allocation4], 0
    // Predicated region
    $region2: #{tpu_custom_call.1} parent=1 // pred_check
      _
    $region3: #{tpu_custom_call.1} parent=1 // pred_check_branch
      %12 = sbr.rel (0) target = $region5
    $region4: #{tpu_custom_call.1} parent=1 // pred_region
      _
    $region5: #{tpu_custom_call.1} parent=1 // pred_fallthru
      _
    // Predicated region
    $region6: #{tpu_custom_call.1} parent=1 // pred_check
      _
    $region7: #{tpu_custom_call.1} parent=1 // pred_check_branch
      %14 = sbr.rel (0) target = $region9
    $region8: #{tpu_custom_call.1} parent=1 // pred_region
      _
    $region9: #{tpu_custom_call.1} parent=1 // pred_fallthru
      _
    // Predicated region
    $region10: #{tpu_custom_call.1} parent=1 // pred_check
      _
    $region11: #{tpu_custom_call.1} parent=1 // pred_check_branch
      %16 = sbr.rel (0) target = $region13
    $region12: #{tpu_custom_call.1} parent=1 // pred_region
      _
    $region13: #{tpu_custom_call.1} parent=1 // pred_fallthru
      _
    // Predicated region
    $region14: #{tpu_custom_call.1} parent=1 // pred_check
      _
    $region15: #{tpu_custom_call.1} parent=1 // pred_check_branch
      %18 = sbr.rel (0) target = $region17
    $region16: #{tpu_custom_call.1} parent=1 // pred_region
      _
    $region17: #{tpu_custom_call.1} parent=1 // pred_fallthru
      _
    // Predicated region
    $region18: #{tpu_custom_call.1} parent=1 // pred_check
      _
    $region19: #{tpu_custom_call.1} parent=1 // pred_check_branch
      %20 = sbr.rel (0) target = $region21
    $region20: #{tpu_custom_call.1} parent=1 // pred_region
      _
    $region21: #{tpu_custom_call.1} parent=1 // pred_fallthru
      _
    %p21 = scmp.eq.s32.totalorder 0, 0
    // Predicated region
    $region22: #{tpu_custom_call.1} parent=1 // pred_check
      %p22 = pneg %p21
    $region23: #{tpu_custom_call.1} parent=1 // pred_check_branch
      %24 = sbr.rel (%p22) target = $region25
    $region24: #{tpu_custom_call.1} parent=1 // pred_region
      %vm25 = vcmask 261120
      %26 = vst.msk [vmem:[#allocation2] sm:$0xff] %vm25, 0.0
      %27 = vst.msk [vmem:[#allocation2 + $0x8] sm:$0xff] %vm25, 0.0
    $region25: #{tpu_custom_call.1} parent=1 // pred_fallthru
      _
    %v28 = vld [vmem:[%s0] sm:$0xff]
    %v29 = vld [vmem:[%s0 + $0x8] sm:$0xff]
    %v30 = vld [vmem:[%s1] sm:$0xff]
    %v31 = vld [vmem:[%s1 + $0x8] sm:$0xff]
    %v32 = vld [vmem:[%s1 + $0x10] sm:$0xff]
    %v33 = vld [vmem:[%s1 + $0x18] sm:$0xff]
    %vm34 = vcmask 261120
    %v36 = vsel %vm34, %v28, 0
    %v39 = vsel %vm34, %v29, 0
    %41 = vmatprep.subr.mxu0 0.0
    %42 = vmatpush1.msra.mxu0 0.0
    %43 = vmatprep.subr.mxu0 0.0
    %44 = vmatpush1.msra.mxu0 0.0
    %45 = vmatprep.subr.mxu0 0.0
    %46 = vmatpush1.msra.mxu0 0.0
    %47 = vmatprep.subr.mxu0 0.0
    %48 = vmatpush1.msra.mxu0 0.0
    %49 = vmatprep.subr.mxu0 0.0
    %50 = vmatpush1.msra.mxu0 0.0
    %51 = vmatprep.subr.mxu0 0.0
    %52 = vmatpush1.msra.mxu0 0.0
    %53 = vmatprep.subr.mxu0 0.0
    %54 = vmatpush1.msra.mxu0 0.0
    %55 = vmatprep.subr.mxu0 0.0
    %56 = vmatpush1.msra.mxu0 0.0
    %57 = vmatprep.subr.mxu0 0.0
    %58 = vmatpush1.msra.mxu0 0.0
    %59 = vmatprep.subr.mxu0 0.0
    %60 = vmatpush1.msra.mxu0 0.0
    %61 = vmatprep.subr.mxu0 0.0
    %62 = vmatpush1.msra.mxu0 0.0
    %63 = vmatprep.subr.mxu0 0.0
    %64 = vmatpush1.msra.mxu0 0.0
    %65 = vmatprep.subr.mxu0 0.0
    %66 = vmatpush1.msra.mxu0 %v33
    %67 = vmatprep.subr.mxu0 0.0
    %68 = vmatpush1.msra.mxu0 %v32
    %69 = vmatprep.subr.mxu0 0.0
    %70 = vmatpush1.msra.mxu0 %v31
    %71 = vmatprep.subr.mxu0 0.0
    %72 = vmatpush1.msra.mxu0 %v30
    %73 = vmatprep.subr.mxu0 0.0
    %74 = vmatpush2.msra.mxu0 0.0
    %75 = vmatprep.subr.mxu0 0.0
    %76 = vmatpush2.msra.mxu0 0.0
    %77 = vmatprep.subr.mxu0 0.0
    %78 = vmatpush2.msra.mxu0 0.0
    %79 = vmatprep.subr.mxu0 0.0
    %80 = vmatpush2.msra.mxu0 0.0
    %81 = vmatprep.subr.mxu0 0.0
    %82 = vmatpush2.msra.mxu0 0.0
    %83 = vmatprep.subr.mxu0 0.0
    %84 = vmatpush2.msra.mxu0 0.0
    %85 = vmatprep.subr.mxu0 0.0
    %86 = vmatpush2.msra.mxu0 0.0
    %87 = vmatprep.subr.mxu0 0.0
    %88 = vmatpush2.msra.mxu0 0.0
    %89 = vmatprep.subr.mxu0 0.0
    %90 = vmatpush2.msra.mxu0 0.0
    %91 = vmatprep.subr.mxu0 0.0
    %92 = vmatpush2.msra.mxu0 0.0
    %93 = vmatprep.subr.mxu0 0.0
    %94 = vmatpush2.msra.mxu0 0.0
    %95 = vmatprep.subr.mxu0 0.0
    %96 = vmatpush2.msra.mxu0 0.0
    %97 = vmatprep.subr.mxu0 0.0
    %98 = vmatpush2.msra.mxu0 0.0
    %99 = vmatprep.subr.mxu0 0.0
    %100 = vmatpush2.msra.mxu0 0.0
    %101 = vmatprep.subr.mxu0 0.0
    %102 = vmatpush2.msra.mxu0 0.0
    %103 = vmatprep.subr.mxu0 0.0
    %104 = vmatpush2.msra.mxu0 0.0
    %105 = vmatprep.mubr.f32.mxu0 0.0
    %106 = vmatmul.mubr.f32.gmra.mxu0 %v36
    %v107 = vpop.f32.mrf.mxu0
    %v108 = vadd.f32 0.0, %v107
    %v109 = vpop.f32.mrf.mxu0
    %110 = vmatprep.mubr.f32.mxu0 0.0
    %111 = vmatmul.mubr.f32.gmra.mxu0 %v39
    %v112 = vpop.f32.mrf.mxu0
    %v113 = vadd.f32 0.0, %v112
    %v114 = vpop.f32.mrf.mxu0
    %115 = vdwg.mxu0
    %v116 = vmul.f32 %v108, %v108
    %v117 = vmul.f32 %v113, %v113
    %v118 = vmul.f32 %v108, %v116
    %v119 = vmul.f32 %v113, %v117
    %v120 = vmul.f32 %v118, 0.044715
    %v121 = vmul.f32 %v119, 0.044715
    %v122 = vadd.f32 %v108, %v120
    %v123 = vadd.f32 %v113, %v121
    %v124 = vmul.f32 %v122, 0.7978846
    %v125 = vmul.f32 %v123, 0.7978846
    %v126 = vtanh.pop %v124
    %v127 = vtanh.pop %v125
    %v128 = vadd.f32 %v126, 1.0
    %v129 = vadd.f32 %v127, 1.0
    %v130 = vmul.f32 %v128, 0.5
    %v131 = vmul.f32 %v129, 0.5
    %v132 = vmul.f32 %v108, %v130
    %v133 = vmul.f32 %v113, %v131
    %v134 = vld [vmem:[%s2] sm:$0xff]
    %v135 = vld [vmem:[%s2 + $0x8] sm:$0xff]
    %v136 = vmul.f32 %v132, %v134
    %v137 = vmul.f32 %v133, %v135
    %v138 = vld [vmem:[#allocation2] sm:$0xff]
    %v139 = vld [vmem:[#allocation2 + $0x8] sm:$0xff]
    %v140 = vld [vmem:[%s3] sm:$0xff]
    %v141 = vld [vmem:[%s3 + $0x8] sm:$0xff]
    %v142 = vld [vmem:[%s3 + $0x10] sm:$0xff]
    %v143 = vld [vmem:[%s3 + $0x18] sm:$0xff]
    %v144 = vld [vmem:[%s3 + $0x20] sm:$0xff]
    %v145 = vld [vmem:[%s3 + $0x28] sm:$0xff]
    %v146 = vld [vmem:[%s3 + $0x30] sm:$0xff]
    %v147 = vld [vmem:[%s3 + $0x38] sm:$0xff]
    %vm148 = vcmask 523264
    %v150 = vsel %vm148, %v136, 0
    %v153 = vsel %vm148, %v137, 0
    %155 = vmatprep.subr.mxu0 0.0
    %156 = vmatpush1.msra.mxu0 0.0
    %157 = vmatprep.subr.mxu0 0.0
    %158 = vmatpush1.msra.mxu0 0.0
    %159 = vmatprep.subr.mxu0 0.0
    %160 = vmatpush1.msra.mxu0 0.0
    %161 = vmatprep.subr.mxu0 0.0
    %162 = vmatpush1.msra.mxu0 0.0
    %163 = vmatprep.subr.mxu0 0.0
    %164 = vmatpush1.msra.mxu0 0.0
    %165 = vmatprep.subr.mxu0 0.0
    %166 = vmatpush1.msra.mxu0 0.0
    %167 = vmatprep.subr.mxu0 0.0
    %168 = vmatpush1.msra.mxu0 0.0
    %169 = vmatprep.subr.mxu0 0.0
    %170 = vmatpush1.msra.mxu0 0.0
    %171 = vmatprep.subr.mxu0 0.0
    %172 = vmatpush1.msra.mxu0 %v147
    %173 = vmatprep.subr.mxu0 0.0
    %174 = vmatpush1.msra.mxu0 %v146
    %175 = vmatprep.subr.mxu0 0.0
    %176 = vmatpush1.msra.mxu0 %v145
    %177 = vmatprep.subr.mxu0 0.0
    %178 = vmatpush1.msra.mxu0 %v144
    %179 = vmatprep.subr.mxu0 0.0
    %180 = vmatpush1.msra.mxu0 %v143
    %181 = vmatprep.subr.mxu0 0.0
    %182 = vmatpush1.msra.mxu0 %v142
    %183 = vmatprep.subr.mxu0 0.0
    %184 = vmatpush1.msra.mxu0 %v141
    %185 = vmatprep.subr.mxu0 0.0
    %186 = vmatpush1.msra.mxu0 %v140
    %187 = vmatprep.subr.mxu0 0.0
    %188 = vmatpush2.msra.mxu0 0.0
    %189 = vmatprep.subr.mxu0 0.0
    %190 = vmatpush2.msra.mxu0 0.0
    %191 = vmatprep.subr.mxu0 0.0
    %192 = vmatpush2.msra.mxu0 0.0
    %193 = vmatprep.subr.mxu0 0.0
    %194 = vmatpush2.msra.mxu0 0.0
    %195 = vmatprep.subr.mxu0 0.0
    %196 = vmatpush2.msra.mxu0 0.0
    %197 = vmatprep.subr.mxu0 0.0
    %198 = vmatpush2.msra.mxu0 0.0
    %199 = vmatprep.subr.mxu0 0.0
    %200 = vmatpush2.msra.mxu0 0.0
    %201 = vmatprep.subr.mxu0 0.0
    %202 = vmatpush2.msra.mxu0 0.0
    %203 = vmatprep.subr.mxu0 0.0
    %204 = vmatpush2.msra.mxu0 0.0
    %205 = vmatprep.subr.mxu0 0.0
    %206 = vmatpush2.msra.mxu0 0.0
    %207 = vmatprep.subr.mxu0 0.0
    %208 = vmatpush2.msra.mxu0 0.0
    %209 = vmatprep.subr.mxu0 0.0
    %210 = vmatpush2.msra.mxu0 0.0
    %211 = vmatprep.subr.mxu0 0.0
    %212 = vmatpush2.msra.mxu0 0.0
    %213 = vmatprep.subr.mxu0 0.0
    %214 = vmatpush2.msra.mxu0 0.0
    %215 = vmatprep.subr.mxu0 0.0
    %216 = vmatpush2.msra.mxu0 0.0
    %217 = vmatprep.subr.mxu0 0.0
    %218 = vmatpush2.msra.mxu0 0.0
    %219 = vmatprep.mubr.f32.mxu0 0.0
    %220 = vmatmul.mubr.f32.gmra.mxu0 %v150
    %v221 = vpop.f32.mrf.mxu0
    %v222 = vadd.f32 0.0, %v221
    %v223 = vpop.f32.mrf.mxu0
    %224 = vmatprep.mubr.f32.mxu0 0.0
    %225 = vmatmul.mubr.f32.gmra.mxu0 %v153
    %v226 = vpop.f32.mrf.mxu0
    %v227 = vadd.f32 0.0, %v226
    %v228 = vpop.f32.mrf.mxu0
    %229 = vdwg.mxu0
    %v230 = vadd.f32 %v138, %v222
    %v231 = vadd.f32 %v139, %v227
    %232 = vst.msk [vmem:[#allocation2] sm:$0xff] %vm34, %v230
    %233 = vst.msk [vmem:[#allocation2 + $0x8] sm:$0xff] %vm34, %v231
    // Predicated region
    $region26: #{tpu_custom_call.1} parent=1 // pred_check
      %p234 = pneg %p21
    $region27: #{tpu_custom_call.1} parent=1 // pred_check_branch
      %236 = sbr.rel (%p234) target = $region29
    $region28: #{tpu_custom_call.1} parent=1 // pred_region
      %v237 = vld [vmem:[#allocation2] sm:$0xff]
      %v238 = vld [vmem:[#allocation2 + $0x8] sm:$0xff]
      %v239 = vld [vmem:[%s4] sm:$0xff]
      %v240 = vld [vmem:[%s4 + $0x8] sm:$0xff]
      %v241 = vmul.f32 %v237, %v239
      %v242 = vmul.f32 %v238, %v240
      %243 = vst.msk [vmem:[#allocation3] sm:$0xff] %vm34, %v241
      %244 = vst.msk [vmem:[#allocation3 + $0x8] sm:$0xff] %vm34, %v242
    $region29: #{tpu_custom_call.1} parent=1 // pred_fallthru
      _
    // Predicated region
    $region30: #{tpu_custom_call.1} parent=1 // pred_check
      _
    $region31: #{tpu_custom_call.1} parent=1 // pred_check_branch
      %246 = sbr.rel (0) target = $region33
    $region32: #{tpu_custom_call.1} parent=1 // pred_region
      %s248 = ssub.s32 256, 256
      %249 = vsyncadd [#allocation4], %s248
      %s250 = sshll.u32 [#allocation3], 4
      %s251 = int_to_ptr.vmem [resolvable:$true] %s250
      %256 = dma.vmem_to_hbm [thread:$0]  %s251, 256, %s5, [#allocation4], 128, 128, 8
    $region33: #{tpu_custom_call.1} parent=1 // pred_fallthru
      _
    // Predicated region
    $region34: #{tpu_custom_call.1} parent=1 // pred_check
      _
    $region35: #{tpu_custom_call.1} parent=1 // pred_check_branch
      %258 = sbr.rel (0) target = $region37
    $region36: #{tpu_custom_call.1} parent=1 // pred_region
      %259 = dma.done [#allocation4], 256
    $region37: #{tpu_custom_call.1} parent=1 // pred_fallthru
      _
    %260 = vsyncpa [#allocation4], 1

</llo_original>
